<compile_context>
chip_gen: v6e
topology: v6e:2x2x1
jax: 0.10.0
libtpu: 0.0.40
codegen_flags: <defaults>
</compile_context>

<pallas_src>
import functools

import jax
import jax.numpy as jnp
from jax.experimental import pallas as pl
from jax.experimental.pallas import tpu as pltpu

IN_DIM = 23
HIDDEN = 512
OUT_DIM = 3
K_PAD = 128     # lane-dense padded input feature dim
OUT_PAD = 128   # lane-dense padded output dim


def _round_up(n, m):
    return ((n + m - 1) // m) * m


def mlp_kernel(x_ref, w1_ref, b1_ref, w2_ref, b2_ref, w3_ref, b3_ref, o_ref):
    # Three MXU matmuls (bf16 operands, f32 accumulation) + VPU ReLUs.
    # All elementwise work stays in f32 (portable across v5e/v6e/v7x).
    h1 = jnp.dot(x_ref[...], w1_ref[...], preferred_element_type=jnp.float32)
    h1 = jnp.maximum(h1 + b1_ref[...], 0.0)

    h2 = jnp.dot(h1.astype(w2_ref.dtype), w2_ref[...],
                 preferred_element_type=jnp.float32)
    h2 = jnp.maximum(h2 + b2_ref[...], 0.0)

    out = jnp.dot(h2.astype(w3_ref.dtype), w3_ref[...],
                  preferred_element_type=jnp.float32)
    o_ref[...] = (out + b3_ref[...]).astype(o_ref.dtype)


@functools.partial(jax.jit, static_argnames=("block_batch",))
def mlp_forward(x, w1, b1, w2, b2, w3, b3, *, block_batch=256):
    """x: (B, 23) f32. Weights pre-transposed: w_k is (in, out); b_k is (1, out)."""
    B = x.shape[0]

    # Zero-pad to lane-dense shapes (no effect on the math).
    x_p = jnp.zeros((B, K_PAD), jnp.float32).at[:, :IN_DIM].set(x)
    w1_p = jnp.zeros((K_PAD, HIDDEN), jnp.float32).at[:IN_DIM, :].set(w1)
    w3_p = jnp.zeros((HIDDEN, OUT_PAD), jnp.float32).at[:, :OUT_DIM].set(w3)
    b3_p = jnp.zeros((1, OUT_PAD), jnp.float32).at[:, :OUT_DIM].set(b3)

    # Batch tile: sublane-aligned (multiple of 8), capped at block_batch; pad
    # the batch so the grid divides evenly (padded rows are sliced off below).
    tb = min(block_batch, _round_up(B, 8))
    b_pad = _round_up(B, tb)
    if b_pad != B:
        x_p = jnp.pad(x_p, ((0, b_pad - B), (0, 0)))

    # bf16 weights/inputs -> half the HBM traffic, native MXU rate.
    x_bf = x_p.astype(jnp.bfloat16)
    w1_bf = w1_p.astype(jnp.bfloat16)
    w2_bf = w2.astype(jnp.bfloat16)
    w3_bf = w3_p.astype(jnp.bfloat16)
    # TODO(synk): on v7x fp8 weights (int8 on v5e/v6e) would halve bytes again.

    grid = (b_pad // tb,)

    flops = 2 * b_pad * (K_PAD * HIDDEN + HIDDEN * HIDDEN + HIDDEN * OUT_PAD)
    bytes_accessed = (
        2 * (x_bf.size + w1_bf.size + w2_bf.size + w3_bf.size)   # bf16 inputs
        + 4 * (b1.size + b2.size + b3_p.size)                    # f32 biases
        + 4 * b_pad * OUT_PAD                                    # f32 output
    )

    out = pl.pallas_call(
        mlp_kernel,
        out_shape=jax.ShapeDtypeStruct((b_pad, OUT_PAD), jnp.float32),
        grid=grid,
        in_specs=[
            pl.BlockSpec((tb, K_PAD), lambda i: (i, 0)),        # x: batch-tiled
            pl.BlockSpec((K_PAD, HIDDEN), lambda i: (0, 0)),    # w1: resident
            pl.BlockSpec((1, HIDDEN), lambda i: (0, 0)),        # b1: resident
            pl.BlockSpec((HIDDEN, HIDDEN), lambda i: (0, 0)),   # w2: resident
            pl.BlockSpec((1, HIDDEN), lambda i: (0, 0)),        # b2: resident
            pl.BlockSpec((HIDDEN, OUT_PAD), lambda i: (0, 0)),  # w3: resident
            pl.BlockSpec((1, OUT_PAD), lambda i: (0, 0)),       # b3: resident
        ],
        out_specs=pl.BlockSpec((tb, OUT_PAD), lambda i: (i, 0)),
        compiler_params=pltpu.CompilerParams(
            dimension_semantics=("parallel",),
            vmem_limit_bytes=32 * 1024 * 1024,
        ),
        cost_estimate=pl.CostEstimate(
            flops=flops, transcendentals=0, bytes_accessed=bytes_accessed),
    )(x_bf, w1_bf, b1, w2_bf, b2, w3_bf, b3_p)

    # Strip batch/output padding.
    return out[:B, :OUT_DIM]


def init_linear_params(key, fan_in, fan_out):
    # Mimics PyTorch nn.Linear default init: U(-1/sqrt(fan_in), 1/sqrt(fan_in)).
    kw, kb = jax.random.split(key)
    bound = 1.0 / jnp.sqrt(fan_in)
    # Stored transposed: (fan_in, fan_out) so the kernel computes x @ W.
    w = jax.random.uniform(kw, (fan_in, fan_out), jnp.float32, -bound, bound)
    b = jax.random.uniform(kb, (1, fan_out), jnp.float32, -bound, bound)
    return w, b


if __name__ == "__main__":
    key = jax.random.PRNGKey(0)
    kx, k1, k2, k3 = jax.random.split(key, 4)

    batch = 8
    x = jax.random.normal(kx, (batch, IN_DIM), jnp.float32)

    w1, b1 = init_linear_params(k1, IN_DIM, HIDDEN)
    w2, b2 = init_linear_params(k2, HIDDEN, HIDDEN)
    w3, b3 = init_linear_params(k3, HIDDEN, OUT_DIM)

    logits = mlp_forward(x, w1, b1, w2, b2, w3, b3)
    jax.block_until_ready(logits)
    assert logits.shape == (batch, OUT_DIM)

    # Pure-JAX reference matching the kernel's bf16-operand / f32-accumulate path.
    def bf(a):
        return a.astype(jnp.bfloat16).astype(jnp.float32)

    ref = jnp.maximum(bf(x) @ bf(w1) + b1, 0.0)
    ref = jnp.maximum(bf(ref) @ bf(w2) + b2, 0.0)
    ref = bf(ref) @ bf(w3) + b3
    assert jnp.allclose(logits, ref, atol=2e-2, rtol=2e-2)

    print("KERNEL_OK")
</pallas_src>

<mosaic_0001>
module attributes {stable_mosaic.version = 11 : i64} {
  func.func @mlp_kernel(%arg0: i32, %arg1: memref<8x128xbf16, #tpu.memory_space<vmem>>, %arg2: memref<128x512xbf16, #tpu.memory_space<vmem>>, %arg3: memref<1x512xf32, #tpu.memory_space<vmem>>, %arg4: memref<512x512xbf16, #tpu.memory_space<vmem>>, %arg5: memref<1x512xf32, #tpu.memory_space<vmem>>, %arg6: memref<512x128xbf16, #tpu.memory_space<vmem>>, %arg7: memref<1x128xf32, #tpu.memory_space<vmem>>, %arg8: memref<8x128xf32, #tpu.memory_space<vmem>>) attributes {dimension_semantics = [#tpu.dimension_semantics<parallel>], iteration_bounds = array<i64: 1>, scalar_prefetch = 0 : i64, scratch_operands = 0 : i64, tpu.core_type = #tpu.core_type<tc>, window_params = [{transform_indices = @transform_0, window_bounds = array<i64: 8, 128>}, {pipeline_mode = #tpu.pipeline_mode<synchronous>, transform_indices = @transform_1, window_bounds = array<i64: 128, 512>}, {pipeline_mode = #tpu.pipeline_mode<synchronous>, transform_indices = @transform_2, window_bounds = array<i64: 1, 512>}, {pipeline_mode = #tpu.pipeline_mode<synchronous>, transform_indices = @transform_3, window_bounds = array<i64: 512, 512>}, {pipeline_mode = #tpu.pipeline_mode<synchronous>, transform_indices = @transform_4, window_bounds = array<i64: 1, 512>}, {pipeline_mode = #tpu.pipeline_mode<synchronous>, transform_indices = @transform_5, window_bounds = array<i64: 512, 128>}, {pipeline_mode = #tpu.pipeline_mode<synchronous>, transform_indices = @transform_6, window_bounds = array<i64: 1, 128>}, {transform_indices = @transform_7, window_bounds = array<i64: 8, 128>}]} {
    %c0 = arith.constant 0 : index
    %c0_0 = arith.constant 0 : index
    %0 = vector.load %arg1[%c0, %c0_0] : memref<8x128xbf16, #tpu.memory_space<vmem>>, vector<8x128xbf16>
    %c0_1 = arith.constant 0 : index
    %c0_2 = arith.constant 0 : index
    %1 = vector.load %arg2[%c0_1, %c0_2] : memref<128x512xbf16, #tpu.memory_space<vmem>>, vector<128x512xbf16>
    %cst = arith.constant dense<0.000000e+00> : vector<8x512xf32>
    %2 = tpu.matmul %0, %1, %cst {dimension_numbers = #tpu.dot_dimension_numbers<[1], [0], [0], [1], [0, 0, 1, 1], [], []>} : vector<8x128xbf16>, vector<128x512xbf16>, vector<8x512xf32> -> vector<8x512xf32>
    %c0_3 = arith.constant 0 : index
    %c0_4 = arith.constant 0 : index
    %3 = vector.load %arg3[%c0_3, %c0_4] : memref<1x512xf32, #tpu.memory_space<vmem>>, vector<1x512xf32>
    %4 = vector.broadcast %3 : vector<1x512xf32> to vector<8x512xf32>
    %5 = arith.addf %2, %4 : vector<8x512xf32>
    %cst_5 = arith.constant 0.000000e+00 : f32
    %6 = vector.broadcast %cst_5 : f32 to vector<8x512xf32>
    %7 = arith.maximumf %5, %6 : vector<8x512xf32>
    %8 = arith.truncf %7 : vector<8x512xf32> to vector<8x512xbf16>
    %c0_6 = arith.constant 0 : index
    %c0_7 = arith.constant 0 : index
    %9 = vector.load %arg4[%c0_6, %c0_7] : memref<512x512xbf16, #tpu.memory_space<vmem>>, vector<512x512xbf16>
    %cst_8 = arith.constant dense<0.000000e+00> : vector<8x512xf32>
    %10 = tpu.matmul %8, %9, %cst_8 {dimension_numbers = #tpu.dot_dimension_numbers<[1], [0], [0], [1], [0, 0, 1, 1], [], []>} : vector<8x512xbf16>, vector<512x512xbf16>, vector<8x512xf32> -> vector<8x512xf32>
    %c0_9 = arith.constant 0 : index
    %c0_10 = arith.constant 0 : index
    %11 = vector.load %arg5[%c0_9, %c0_10] : memref<1x512xf32, #tpu.memory_space<vmem>>, vector<1x512xf32>
    %12 = vector.broadcast %11 : vector<1x512xf32> to vector<8x512xf32>
    %13 = arith.addf %10, %12 : vector<8x512xf32>
    %cst_11 = arith.constant 0.000000e+00 : f32
    %14 = vector.broadcast %cst_11 : f32 to vector<8x512xf32>
    %15 = arith.maximumf %13, %14 : vector<8x512xf32>
    %16 = arith.truncf %15 : vector<8x512xf32> to vector<8x512xbf16>
    %c0_12 = arith.constant 0 : index
    %c0_13 = arith.constant 0 : index
    %17 = vector.load %arg6[%c0_12, %c0_13] : memref<512x128xbf16, #tpu.memory_space<vmem>>, vector<512x128xbf16>
    %cst_14 = arith.constant dense<0.000000e+00> : vector<8x128xf32>
    %18 = tpu.matmul %16, %17, %cst_14 {dimension_numbers = #tpu.dot_dimension_numbers<[1], [0], [0], [1], [0, 0, 1, 1], [], []>} : vector<8x512xbf16>, vector<512x128xbf16>, vector<8x128xf32> -> vector<8x128xf32>
    %c0_15 = arith.constant 0 : index
    %c0_16 = arith.constant 0 : index
    %19 = vector.load %arg7[%c0_15, %c0_16] : memref<1x128xf32, #tpu.memory_space<vmem>>, vector<1x128xf32>
    %20 = vector.broadcast %19 : vector<1x128xf32> to vector<8x128xf32>
    %21 = arith.addf %18, %20 : vector<8x128xf32>
    %c0_17 = arith.constant 0 : index
    %c0_18 = arith.constant 0 : index
    %22 = vector.load %arg8[%c0_17, %c0_18] : memref<8x128xf32, #tpu.memory_space<vmem>>, vector<8x128xf32>
    tpu.vector_store %arg8[%c0_17, %c0_18], %21 {strides = array<i32>} : memref<8x128xf32, #tpu.memory_space<vmem>>, vector<8x128xf32>,
    return
  }
  func.func @transform_0(%arg0: i32) -> (i32, i32) {
    %c0_i32 = arith.constant 0 : i32
    %c0_i32_0 = arith.constant 0 : i32
    return %arg0, %c0_i32 : i32, i32
  }
  func.func @transform_1(%arg0: i32) -> (i32, i32) {
    %c0_i32 = arith.constant 0 : i32
    %c0_i32_0 = arith.constant 0 : i32
    %c0_i32_1 = arith.constant 0 : i32
    return %c0_i32, %c0_i32_0 : i32, i32
  }
  func.func @transform_2(%arg0: i32) -> (i32, i32) {
    %c0_i32 = arith.constant 0 : i32
    %c0_i32_0 = arith.constant 0 : i32
    %c0_i32_1 = arith.constant 0 : i32
    return %c0_i32, %c0_i32_0 : i32, i32
  }
  func.func @transform_3(%arg0: i32) -> (i32, i32) {
    %c0_i32 = arith.constant 0 : i32
    %c0_i32_0 = arith.constant 0 : i32
    %c0_i32_1 = arith.constant 0 : i32
    return %c0_i32, %c0_i32_0 : i32, i32
  }
  func.func @transform_4(%arg0: i32) -> (i32, i32) {
    %c0_i32 = arith.constant 0 : i32
    %c0_i32_0 = arith.constant 0 : i32
    %c0_i32_1 = arith.constant 0 : i32
    return %c0_i32, %c0_i32_0 : i32, i32
  }
  func.func @transform_5(%arg0: i32) -> (i32, i32) {
    %c0_i32 = arith.constant 0 : i32
    %c0_i32_0 = arith.constant 0 : i32
    %c0_i32_1 = arith.constant 0 : i32
    return %c0_i32, %c0_i32_0 : i32, i32
  }
  func.func @transform_6(%arg0: i32) -> (i32, i32) {
    %c0_i32 = arith.constant 0 : i32
    %c0_i32_0 = arith.constant 0 : i32
    %c0_i32_1 = arith.constant 0 : i32
    return %c0_i32, %c0_i32_0 : i32, i32
  }
  func.func @transform_7(%arg0: i32) -> (i32, i32) {
    %c0_i32 = arith.constant 0 : i32
    %c0_i32_0 = arith.constant 0 : i32
    return %arg0, %c0_i32 : i32, i32
  }
}

</mosaic_0001>

<llo_original>
// kernel: mlp_forward.1
$region0: #{mlp_forward.1}
  #allocation0 [shape = 'u32[]', space=smem, size = 0x4, offset = 0x4, fixed_abs, tag = 'smem constant byte address 0x4 - core index']
  #allocation1 [shape = 'u32[144,128]{1,0:T(1,128)}', space=vmem, size = 0x12000, scoped, tag = 'internal scratch']
  %s0 = inlined_call_operand.vmem [shape: bf16[8,128], index: 0, kind: input, shape index: {}]
  %s1 = inlined_call_operand.vmem [shape: bf16[128,512], index: 1, kind: input, shape index: {}]
  %s2 = inlined_call_operand.vmem [shape: f32[1,512], index: 2, kind: input, shape index: {}]
  %s3 = inlined_call_operand.vmem [shape: bf16[512,512], index: 3, kind: input, shape index: {}]
  %s4 = inlined_call_operand.vmem [shape: f32[1,512], index: 4, kind: input, shape index: {}]
  %s5 = inlined_call_operand.vmem [shape: bf16[512,128], index: 5, kind: input, shape index: {}]
  %s6 = inlined_call_operand.vmem [shape: f32[1,128], index: 6, kind: input, shape index: {}]
  %s7 = inlined_call_operand.vmem [shape: f32[8,128], index: 7, kind: output, shape index: {}]
  %s8 = sld [smem:[#allocation0]]
  $region38: #{mlp_forward.1} parent=0
    _
  %s10 = ssub.s32 1, %s8
  %s11 = scalar_select 0, %s10, %s8
  // Predicated region
  $region2: #{mlp_forward.1} parent=0 // pred_check
    _
  $region3: #{mlp_forward.1} parent=0 // pred_check_branch
    %13 = sbr.rel (0) target = $region5
  $region4: #{mlp_forward.1} parent=0 // pred_region
    _
  $region5: #{mlp_forward.1} parent=0 // pred_fallthru
    _
  // Predicated region
  $region6: #{mlp_forward.1} parent=0 // pred_check
    _
  $region7: #{mlp_forward.1} parent=0 // pred_check_branch
    %15 = sbr.rel (0) target = $region9
  $region8: #{mlp_forward.1} parent=0 // pred_region
    _
  $region9: #{mlp_forward.1} parent=0 // pred_fallthru
    _
  // Predicated region
  $region10: #{mlp_forward.1} parent=0 // pred_check
    _
  $region11: #{mlp_forward.1} parent=0 // pred_check_branch
    %17 = sbr.rel (0) target = $region13
  $region12: #{mlp_forward.1} parent=0 // pred_region
    _
  $region13: #{mlp_forward.1} parent=0 // pred_fallthru
    _
  // Predicated region
  $region14: #{mlp_forward.1} parent=0 // pred_check
    _
  $region15: #{mlp_forward.1} parent=0 // pred_check_branch
    %19 = sbr.rel (0) target = $region17
  $region16: #{mlp_forward.1} parent=0 // pred_region
    _
  $region17: #{mlp_forward.1} parent=0 // pred_fallthru
    _
  // Predicated region
  $region18: #{mlp_forward.1} parent=0 // pred_check
    _
  $region19: #{mlp_forward.1} parent=0 // pred_check_branch
    %21 = sbr.rel (0) target = $region21
  $region20: #{mlp_forward.1} parent=0 // pred_region
    _
  $region21: #{mlp_forward.1} parent=0 // pred_fallthru
    _
  // Predicated region
  $region22: #{mlp_forward.1} parent=0 // pred_check
    _
  $region23: #{mlp_forward.1} parent=0 // pred_check_branch
    %23 = sbr.rel (0) target = $region25
  $region24: #{mlp_forward.1} parent=0 // pred_region
    _
  $region25: #{mlp_forward.1} parent=0 // pred_fallthru
    _
  // Predicated region
  $region26: #{mlp_forward.1} parent=0 // pred_check
    _
  $region27: #{mlp_forward.1} parent=0 // pred_check_branch
    %25 = sbr.rel (0) target = $region29
  $region28: #{mlp_forward.1} parent=0 // pred_region
    _
  $region29: #{mlp_forward.1} parent=0 // pred_fallthru
    _
  %v27 = vld [vmem:[%s0] sm:$0xf]
  %v28 = vld [vmem:[%s1] sm:$0xff]
  %v29 = vld [vmem:[%s1 + $0x8] sm:$0xff]
  %v30 = vld [vmem:[%s1 + $0x10] sm:$0xff]
  %v31 = vld [vmem:[%s1 + $0x18] sm:$0xff]
  %v32 = vld [vmem:[%s1 + $0x20] sm:$0xff]
  %v33 = vld [vmem:[%s1 + $0x28] sm:$0xff]
  %v34 = vld [vmem:[%s1 + $0x30] sm:$0xff]
  %v35 = vld [vmem:[%s1 + $0x38] sm:$0xff]
  %v36 = vld [vmem:[%s1 + $0x40] sm:$0xff]
  %v37 = vld [vmem:[%s1 + $0x48] sm:$0xff]
  %v38 = vld [vmem:[%s1 + $0x50] sm:$0xff]
  %v39 = vld [vmem:[%s1 + $0x58] sm:$0xff]
  %v40 = vld [vmem:[%s1 + $0x60] sm:$0xff]
  %v41 = vld [vmem:[%s1 + $0x68] sm:$0xff]
  %v42 = vld [vmem:[%s1 + $0x70] sm:$0xff]
  %v43 = vld [vmem:[%s1 + $0x78] sm:$0xff]
  %v44 = vld [vmem:[%s1 + $0x80] sm:$0xff]
  %v45 = vld [vmem:[%s1 + $0x88] sm:$0xff]
  %v46 = vld [vmem:[%s1 + $0x90] sm:$0xff]
  %v47 = vld [vmem:[%s1 + $0x98] sm:$0xff]
  %v48 = vld [vmem:[%s1 + $0xa0] sm:$0xff]
  %v49 = vld [vmem:[%s1 + $0xa8] sm:$0xff]
  %v50 = vld [vmem:[%s1 + $0xb0] sm:$0xff]
  %v51 = vld [vmem:[%s1 + $0xb8] sm:$0xff]
  %v52 = vld [vmem:[%s1 + $0xc0] sm:$0xff]
  %v53 = vld [vmem:[%s1 + $0xc8] sm:$0xff]
  %v54 = vld [vmem:[%s1 + $0xd0] sm:$0xff]
  %v55 = vld [vmem:[%s1 + $0xd8] sm:$0xff]
  %v56 = vld [vmem:[%s1 + $0xe0] sm:$0xff]
  %v57 = vld [vmem:[%s1 + $0xe8] sm:$0xff]
  %v58 = vld [vmem:[%s1 + $0xf0] sm:$0xff]
  %v59 = vld [vmem:[%s1 + $0xf8] sm:$0xff]
  %v60 = vld [vmem:[%s2] sm:$0xf]
  %v62 = vlaneseq
  %v63 = vshrl.u32 %v62, 7
  %v64 = vsub.s32 0, %v63
  %v65 = vrot.slane %v60, %v64
  %v66 = vlaneseq
  %v67 = vshrl.u32 %v66, 7
  %v68 = vsub.s32 1, %v67
  %v69 = vrot.slane %v60, %v68
  %v70 = vlaneseq
  %v71 = vshrl.u32 %v70, 7
  %v72 = vsub.s32 2, %v71
  %v73 = vrot.slane %v60, %v72
  %v74 = vlaneseq
  %v75 = vshrl.u32 %v74, 7
  %v76 = vsub.s32 3, %v75
  %v77 = vrot.slane %v60, %v76
  %v114 = vunpack.c.l.b16 %v28
  %v115 = vunpack.c.h.b16 %v28
  %v116 = vunpack.c.l.b16 %v29
  %v117 = vunpack.c.h.b16 %v29
  %v118 = vunpack.c.l.b16 %v30
  %v119 = vunpack.c.h.b16 %v30
  %v120 = vunpack.c.l.b16 %v31
  %v121 = vunpack.c.h.b16 %v31
  %v122 = vunpack.c.l.b16 %v32
  %v123 = vunpack.c.h.b16 %v32
  %v124 = vunpack.c.l.b16 %v33
  %v125 = vunpack.c.h.b16 %v33
  %v126 = vunpack.c.l.b16 %v34
  %v127 = vunpack.c.h.b16 %v34
  %v128 = vunpack.c.l.b16 %v35
  %v129 = vunpack.c.h.b16 %v35
  %v130 = vunpack.c.l.b16 %v36
  %v131 = vunpack.c.h.b16 %v36
  %v132 = vunpack.c.l.b16 %v37
  %v133 = vunpack.c.h.b16 %v37
  %v134 = vunpack.c.l.b16 %v38
  %v135 = vunpack.c.h.b16 %v38
  %v136 = vunpack.c.l.b16 %v39
  %v137 = vunpack.c.h.b16 %v39
  %v138 = vunpack.c.l.b16 %v40
  %v139 = vunpack.c.h.b16 %v40
  %v140 = vunpack.c.l.b16 %v41
  %v141 = vunpack.c.h.b16 %v41
  %v142 = vunpack.c.l.b16 %v42
  %v143 = vunpack.c.h.b16 %v42
  %v144 = vunpack.c.l.b16 %v43
  %v145 = vunpack.c.h.b16 %v43
  %v146 = vunpack.c.l.b16 %v44
  %v147 = vunpack.c.h.b16 %v44
  %v148 = vunpack.c.l.b16 %v45
  %v149 = vunpack.c.h.b16 %v45
  %v150 = vunpack.c.l.b16 %v46
  %v151 = vunpack.c.h.b16 %v46
  %v152 = vunpack.c.l.b16 %v47
  %v153 = vunpack.c.h.b16 %v47
  %v154 = vunpack.c.l.b16 %v48
  %v155 = vunpack.c.h.b16 %v48
  %v156 = vunpack.c.l.b16 %v49
  %v157 = vunpack.c.h.b16 %v49
  %v158 = vunpack.c.l.b16 %v50
  %v159 = vunpack.c.h.b16 %v50
  %v160 = vunpack.c.l.b16 %v51
  %v161 = vunpack.c.h.b16 %v51
  %v162 = vunpack.c.l.b16 %v52
  %v163 = vunpack.c.h.b16 %v52
  %v164 = vunpack.c.l.b16 %v53
  %v165 = vunpack.c.h.b16 %v53
  %v166 = vunpack.c.l.b16 %v54
  %v167 = vunpack.c.h.b16 %v54
  %v168 = vunpack.c.l.b16 %v55
  %v169 = vunpack.c.h.b16 %v55
  %v170 = vunpack.c.l.b16 %v56
  %v171 = vunpack.c.h.b16 %v56
  %v172 = vunpack.c.l.b16 %v57
  %v173 = vunpack.c.h.b16 %v57
  %v174 = vunpack.c.l.b16 %v58
  %v175 = vunpack.c.h.b16 %v58
  %v176 = vunpack.c.l.b16 %v59
  %v177 = vunpack.c.h.b16 %v59
  %v178 = vpack.c.b16 %v118, %v114
  %v179 = vpack.c.b16 %v119, %v115
  %v180 = vpack.c.b16 %v120, %v116
  %v181 = vpack.c.b16 %v121, %v117
  %v182 = vpack.c.b16 %v126, %v122
  %v183 = vpack.c.b16 %v127, %v123
  %v184 = vpack.c.b16 %v128, %v124
  %v185 = vpack.c.b16 %v129, %v125
  %v186 = vpack.c.b16 %v134, %v130
  %v187 = vpack.c.b16 %v135, %v131
  %v188 = vpack.c.b16 %v136, %v132
  %v189 = vpack.c.b16 %v137, %v133
  %v190 = vpack.c.b16 %v142, %v138
  %v191 = vpack.c.b16 %v143, %v139
  %v192 = vpack.c.b16 %v144, %v140
  %v193 = vpack.c.b16 %v145, %v141
  %v194 = vpack.c.b16 %v150, %v146
  %v195 = vpack.c.b16 %v151, %v147
  %v196 = vpack.c.b16 %v152, %v148
  %v197 = vpack.c.b16 %v153, %v149
  %v198 = vpack.c.b16 %v158, %v154
  %v199 = vpack.c.b16 %v159, %v155
  %v200 = vpack.c.b16 %v160, %v156
  %v201 = vpack.c.b16 %v161, %v157
  %v202 = vpack.c.b16 %v166, %v162
  %v203 = vpack.c.b16 %v167, %v163
  %v204 = vpack.c.b16 %v168, %v164
  %v205 = vpack.c.b16 %v169, %v165
  %v206 = vpack.c.b16 %v174, %v170
  %v207 = vpack.c.b16 %v175, %v171
  %v208 = vpack.c.b16 %v176, %v172
  %v209 = vpack.c.b16 %v177, %v173
  %242 = vmatprep.subr.bf16.mxu0 %v207
  %243 = vmatpush1.bf16.msra.mxu0 %v206
  %244 = vmatprep.subr.bf16.mxu0 %v203
  %245 = vmatpush1.bf16.msra.mxu0 %v202
  %246 = vmatprep.subr.bf16.mxu0 %v199
  %247 = vmatpush1.bf16.msra.mxu0 %v198
  %248 = vmatprep.subr.bf16.mxu0 %v195
  %249 = vmatpush1.bf16.msra.mxu0 %v194
  %250 = vmatprep.subr.bf16.mxu0 %v191
  %251 = vmatpush1.bf16.msra.mxu0 %v190
  %252 = vmatprep.subr.bf16.mxu0 %v187
  %253 = vmatpush1.bf16.msra.mxu0 %v186
  %254 = vmatprep.subr.bf16.mxu0 %v183
  %255 = vmatpush1.bf16.msra.mxu0 %v182
  %256 = vmatprep.subr.bf16.mxu0 %v179
  %257 = vmatpush1.bf16.msra.mxu0 %v178
  %258 = vmatprep.subr.bf16.mxu0 0
  %259 = vmatpush2.bf16.msra.mxu0 0
  %260 = vmatprep.subr.bf16.mxu0 0
  %261 = vmatpush2.bf16.msra.mxu0 0
  %262 = vmatprep.subr.bf16.mxu0 0
  %263 = vmatpush2.bf16.msra.mxu0 0
  %264 = vmatprep.subr.bf16.mxu0 0
  %265 = vmatpush2.bf16.msra.mxu0 0
  %266 = vmatprep.subr.bf16.mxu0 0
  %267 = vmatpush2.bf16.msra.mxu0 0
  %268 = vmatprep.subr.bf16.mxu0 0
  %269 = vmatpush2.bf16.msra.mxu0 0
  %270 = vmatprep.subr.bf16.mxu0 0
  %271 = vmatpush2.bf16.msra.mxu0 0
  %272 = vmatprep.subr.bf16.mxu0 0
  %273 = vmatpush2.bf16.msra.mxu0 0
  %274 = vmatprep.mubr.bf16.mxu0 0
  %275 = vmatmul.mubr.bf16.gmra.mxu0 %v27
  %v276 = vpop.f32.mrf.mxu0
  %v277 = vadd.f32 %v65, %v276
  %v278 = vpop.f32.mrf.mxu0
  %v279 = vadd.f32 %v69, %v278
  %v280 = vpop.f32.mrf.mxu0
  %v281 = vpop.f32.mrf.mxu0
  %282 = vdwg.mxu0
  %283 = vmatprep.subr.bf16.mxu0 %v209
  %284 = vmatpush1.bf16.msra.mxu0 %v208
  %285 = vmatprep.subr.bf16.mxu0 %v205
  %286 = vmatpush1.bf16.msra.mxu0 %v204
  %287 = vmatprep.subr.bf16.mxu0 %v201
  %288 = vmatpush1.bf16.msra.mxu0 %v200
  %289 = vmatprep.subr.bf16.mxu0 %v197
  %290 = vmatpush1.bf16.msra.mxu0 %v196
  %291 = vmatprep.subr.bf16.mxu0 %v193
  %292 = vmatpush1.bf16.msra.mxu0 %v192
  %293 = vmatprep.subr.bf16.mxu0 %v189
  %294 = vmatpush1.bf16.msra.mxu0 %v188
  %295 = vmatprep.subr.bf16.mxu0 %v185
  %296 = vmatpush1.bf16.msra.mxu0 %v184
  %297 = vmatprep.subr.bf16.mxu0 %v181
  %298 = vmatpush1.bf16.msra.mxu0 %v180
  %299 = vmatprep.subr.bf16.mxu0 0
  %300 = vmatpush2.bf16.msra.mxu0 0
  %301 = vmatprep.subr.bf16.mxu0 0
  %302 = vmatpush2.bf16.msra.mxu0 0
  %303 = vmatprep.subr.bf16.mxu0 0
  %304 = vmatpush2.bf16.msra.mxu0 0
  %305 = vmatprep.subr.bf16.mxu0 0
  %306 = vmatpush2.bf16.msra.mxu0 0
  %307 = vmatprep.subr.bf16.mxu0 0
  %308 = vmatpush2.bf16.msra.mxu0 0
  %309 = vmatprep.subr.bf16.mxu0 0
  %310 = vmatpush2.bf16.msra.mxu0 0
  %311 = vmatprep.subr.bf16.mxu0 0
  %312 = vmatpush2.bf16.msra.mxu0 0
  %313 = vmatprep.subr.bf16.mxu0 0
  %314 = vmatpush2.bf16.msra.mxu0 0
  %315 = vmatprep.mubr.bf16.mxu0 0
  %316 = vmatmul.mubr.bf16.gmra.mxu0 %v27
  %v317 = vpop.f32.mrf.mxu0
  %v318 = vadd.f32 %v73, %v317
  %v319 = vpop.f32.mrf.mxu0
  %v320 = vadd.f32 %v77, %v319
  %v321 = vpop.f32.mrf.mxu0
  %v322 = vpop.f32.mrf.mxu0
  %323 = vdwg.mxu0
  %v324 = vmax.f32 %v277, 0.0
  %v325 = vmax.f32 %v279, 0.0
  %v326 = vmax.f32 %v318, 0.0
  %v327 = vmax.f32 %v320, 0.0
  %v328 = vpack.c.bf16 %v324, %v324
  %v329 = vpack.c.bf16 %v325, %v325
  %v330 = vpack.c.bf16 %v326, %v326
  %v331 = vpack.c.bf16 %v327, %v327
  %v332 = vld [vmem:[%s3] sm:$0xff]
  %v333 = vld [vmem:[%s3 + $0x8] sm:$0xff]
  %v334 = vld [vmem:[%s3 + $0x10] sm:$0xff]
  %v335 = vld [vmem:[%s3 + $0x18] sm:$0xff]
  %v336 = vld [vmem:[%s3 + $0x20] sm:$0xff]
  %v337 = vld [vmem:[%s3 + $0x28] sm:$0xff]
  %v338 = vld [vmem:[%s3 + $0x30] sm:$0xff]
  %v339 = vld [vmem:[%s3 + $0x38] sm:$0xff]
  %v340 = vld [vmem:[%s3 + $0x40] sm:$0xff]
  %v341 = vld [vmem:[%s3 + $0x48] sm:$0xff]
  %v342 = vld [vmem:[%s3 + $0x50] sm:$0xff]
  %v343 = vld [vmem:[%s3 + $0x58] sm:$0xff]
  %v344 = vld [vmem:[%s3 + $0x60] sm:$0xff]
  %v345 = vld [vmem:[%s3 + $0x68] sm:$0xff]
  %v346 = vld [vmem:[%s3 + $0x70] sm:$0xff]
  %v347 = vld [vmem:[%s3 + $0x78] sm:$0xff]
  %v348 = vld [vmem:[%s3 + $0x80] sm:$0xff]
  %v349 = vld [vmem:[%s3 + $0x88] sm:$0xff]
  %v350 = vld [vmem:[%s3 + $0x90] sm:$0xff]
  %v351 = vld [vmem:[%s3 + $0x98] sm:$0xff]
  %v352 = vld [vmem:[%s3 + $0xa0] sm:$0xff]
  %v353 = vld [vmem:[%s3 + $0xa8] sm:$0xff]
  %v354 = vld [vmem:[%s3 + $0xb0] sm:$0xff]
  %v355 = vld [vmem:[%s3 + $0xb8] sm:$0xff]
  %v356 = vld [vmem:[%s3 + $0xc0] sm:$0xff]
  %v357 = vld [vmem:[%s3 + $0xc8] sm:$0xff]
  %v358 = vld [vmem:[%s3 + $0xd0] sm:$0xff]
  %v359 = vld [vmem:[%s3 + $0xd8] sm:$0xff]
  %v360 = vld [vmem:[%s3 + $0xe0] sm:$0xff]
  %v361 = vld [vmem:[%s3 + $0xe8] sm:$0xff]
  %v362 = vld [vmem:[%s3 + $0xf0] sm:$0xff]
  %v363 = vld [vmem:[%s3 + $0xf8] sm:$0xff]
  %v364 = vld [vmem:[%s3 + $0x100] sm:$0xff]
  %v365 = vld [vmem:[%s3 + $0x108] sm:$0xff]
  %v366 = vld [vmem:[%s3 + $0x110] sm:$0xff]
  %v367 = vld [vmem:[%s3 + $0x118] sm:$0xff]
  %v368 = vld [vmem:[%s3 + $0x120] sm:$0xff]
  %v369 = vld [vmem:[%s3 + $0x128] sm:$0xff]
  %v370 = vld [vmem:[%s3 + $0x130] sm:$0xff]
  %v371 = vld [vmem:[%s3 + $0x138] sm:$0xff]
  %v372 = vld [vmem:[%s3 + $0x140] sm:$0xff]
  %v373 = vld [vmem:[%s3 + $0x148] sm:$0xff]
  %v374 = vld [vmem:[%s3 + $0x150] sm:$0xff]
  %v375 = vld [vmem:[%s3 + $0x158] sm:$0xff]
  %v376 = vld [vmem:[%s3 + $0x160] sm:$0xff]
  %v377 = vld [vmem:[%s3 + $0x168] sm:$0xff]
  %v378 = vld [vmem:[%s3 + $0x170] sm:$0xff]
  %v379 = vld [vmem:[%s3 + $0x178] sm:$0xff]
  %v380 = vld [vmem:[%s3 + $0x180] sm:$0xff]
  %v381 = vld [vmem:[%s3 + $0x188] sm:$0xff]
  %v382 = vld [vmem:[%s3 + $0x190] sm:$0xff]
  %v383 = vld [vmem:[%s3 + $0x198] sm:$0xff]
  %v384 = vld [vmem:[%s3 + $0x1a0] sm:$0xff]
  %v385 = vld [vmem:[%s3 + $0x1a8] sm:$0xff]
  %v386 = vld [vmem:[%s3 + $0x1b0] sm:$0xff]
  %v387 = vld [vmem:[%s3 + $0x1b8] sm:$0xff]
  %v388 = vld [vmem:[%s3 + $0x1c0] sm:$0xff]
  %v389 = vld [vmem:[%s3 + $0x1c8] sm:$0xff]
  %v390 = vld [vmem:[%s3 + $0x1d0] sm:$0xff]
  %v391 = vld [vmem:[%s3 + $0x1d8] sm:$0xff]
  %v392 = vld [vmem:[%s3 + $0x1e0] sm:$0xff]
  %v393 = vld [vmem:[%s3 + $0x1e8] sm:$0xff]
  %v394 = vld [vmem:[%s3 + $0x1f0] sm:$0xff]
  %v395 = vld [vmem:[%s3 + $0x1f8] sm:$0xff]
  %v396 = vld [vmem:[%s3 + $0x200] sm:$0xff]
  %v397 = vld [vmem:[%s3 + $0x208] sm:$0xff]
  %v398 = vld [vmem:[%s3 + $0x210] sm:$0xff]
  %v399 = vld [vmem:[%s3 + $0x218] sm:$0xff]
  %v400 = vld [vmem:[%s3 + $0x220] sm:$0xff]
  %v401 = vld [vmem:[%s3 + $0x228] sm:$0xff]
  %v402 = vld [vmem:[%s3 + $0x230] sm:$0xff]
  %v403 = vld [vmem:[%s3 + $0x238] sm:$0xff]
  %v404 = vld [vmem:[%s3 + $0x240] sm:$0xff]
  %v405 = vld [vmem:[%s3 + $0x248] sm:$0xff]
  %v406 = vld [vmem:[%s3 + $0x250] sm:$0xff]
  %v407 = vld [vmem:[%s3 + $0x258] sm:$0xff]
  %v408 = vld [vmem:[%s3 + $0x260] sm:$0xff]
  %v409 = vld [vmem:[%s3 + $0x268] sm:$0xff]
  %v410 = vld [vmem:[%s3 + $0x270] sm:$0xff]
  %v411 = vld [vmem:[%s3 + $0x278] sm:$0xff]
  %v412 = vld [vmem:[%s3 + $0x280] sm:$0xff]
  %v413 = vld [vmem:[%s3 + $0x288] sm:$0xff]
  %v414 = vld [vmem:[%s3 + $0x290] sm:$0xff]
  %v415 = vld [vmem:[%s3 + $0x298] sm:$0xff]
  %v416 = vld [vmem:[%s3 + $0x2a0] sm:$0xff]
  %v417 = vld [vmem:[%s3 + $0x2a8] sm:$0xff]
  %v418 = vld [vmem:[%s3 + $0x2b0] sm:$0xff]
  %v419 = vld [vmem:[%s3 + $0x2b8] sm:$0xff]
  %v420 = vld [vmem:[%s3 + $0x2c0] sm:$0xff]
  %v421 = vld [vmem:[%s3 + $0x2c8] sm:$0xff]
  %v422 = vld [vmem:[%s3 + $0x2d0] sm:$0xff]
  %v423 = vld [vmem:[%s3 + $0x2d8] sm:$0xff]
  %v424 = vld [vmem:[%s3 + $0x2e0] sm:$0xff]
  %v425 = vld [vmem:[%s3 + $0x2e8] sm:$0xff]
  %v426 = vld [vmem:[%s3 + $0x2f0] sm:$0xff]
  %v427 = vld [vmem:[%s3 + $0x2f8] sm:$0xff]
  %v428 = vld [vmem:[%s3 + $0x300] sm:$0xff]
  %v429 = vld [vmem:[%s3 + $0x308] sm:$0xff]
  %v430 = vld [vmem:[%s3 + $0x310] sm:$0xff]
  %v431 = vld [vmem:[%s3 + $0x318] sm:$0xff]
  %v432 = vld [vmem:[%s3 + $0x320] sm:$0xff]
  %v433 = vld [vmem:[%s3 + $0x328] sm:$0xff]
  %v434 = vld [vmem:[%s3 + $0x330] sm:$0xff]
  %v435 = vld [vmem:[%s3 + $0x338] sm:$0xff]
  %v436 = vld [vmem:[%s3 + $0x340] sm:$0xff]
  %v437 = vld [vmem:[%s3 + $0x348] sm:$0xff]
  %v438 = vld [vmem:[%s3 + $0x350] sm:$0xff]
  %v439 = vld [vmem:[%s3 + $0x358] sm:$0xff]
  %v440 = vld [vmem:[%s3 + $0x360] sm:$0xff]
  %v441 = vld [vmem:[%s3 + $0x368] sm:$0xff]
  %v442 = vld [vmem:[%s3 + $0x370] sm:$0xff]
  %v443 = vld [vmem:[%s3 + $0x378] sm:$0xff]
  %v444 = vld [vmem:[%s3 + $0x380] sm:$0xff]
  %v445 = vld [vmem:[%s3 + $0x388] sm:$0xff]
  %v446 = vld [vmem:[%s3 + $0x390] sm:$0xff]
  %v447 = vld [vmem:[%s3 + $0x398] sm:$0xff]
  %v448 = vld [vmem:[%s3 + $0x3a0] sm:$0xff]
  %v449 = vld [vmem:[%s3 + $0x3a8] sm:$0xff]
  %v450 = vld [vmem:[%s3 + $0x3b0] sm:$0xff]
  %v451 = vld [vmem:[%s3 + $0x3b8] sm:$0xff]
  %v452 = vld [vmem:[%s3 + $0x3c0] sm:$0xff]
  %v453 = vld [vmem:[%s3 + $0x3c8] sm:$0xff]
  %v454 = vld [vmem:[%s3 + $0x3d0] sm:$0xff]
  %v455 = vld [vmem:[%s3 + $0x3d8] sm:$0xff]
  %v456 = vld [vmem:[%s3 + $0x3e0] sm:$0xff]
  %v457 = vld [vmem:[%s3 + $0x3e8] sm:$0xff]
  %v458 = vld [vmem:[%s3 + $0x3f0] sm:$0xff]
  %v459 = vld [vmem:[%s3 + $0x3f8] sm:$0xff]
  %v460 = vld [vmem:[%s4] sm:$0xf]
  %v462 = vlaneseq
  %v463 = vshrl.u32 %v462, 7
  %v464 = vsub.s32 0, %v463
  %v465 = vrot.slane %v460, %v464
  %v466 = vlaneseq
  %v467 = vshrl.u32 %v466, 7
  %v468 = vsub.s32 1, %v467
  %v469 = vrot.slane %v460, %v468
  %v470 = vlaneseq
  %v471 = vshrl.u32 %v470, 7
  %v472 = vsub.s32 2, %v471
  %v473 = vrot.slane %v460, %v472
  %v474 = vlaneseq
  %v475 = vshrl.u32 %v474, 7
  %v476 = vsub.s32 3, %v475
  %v477 = vrot.slane %v460, %v476
  %v610 = vunpack.c.l.b16 %v332
  %v611 = vunpack.c.h.b16 %v332
  %v612 = vunpack.c.l.b16 %v333
  %v613 = vunpack.c.h.b16 %v333
  %v614 = vunpack.c.l.b16 %v334
  %v615 = vunpack.c.h.b16 %v334
  %v616 = vunpack.c.l.b16 %v335
  %v617 = vunpack.c.h.b16 %v335
  %v618 = vunpack.c.l.b16 %v336
  %v619 = vunpack.c.h.b16 %v336
  %v620 = vunpack.c.l.b16 %v337
  %v621 = vunpack.c.h.b16 %v337
  %v622 = vunpack.c.l.b16 %v338
  %v623 = vunpack.c.h.b16 %v338
  %v624 = vunpack.c.l.b16 %v339
  %v625 = vunpack.c.h.b16 %v339
  %v626 = vunpack.c.l.b16 %v340
  %v627 = vunpack.c.h.b16 %v340
  %v628 = vunpack.c.l.b16 %v341
  %v629 = vunpack.c.h.b16 %v341
  %v630 = vunpack.c.l.b16 %v342
  %v631 = vunpack.c.h.b16 %v342
  %v632 = vunpack.c.l.b16 %v343
  %v633 = vunpack.c.h.b16 %v343
  %v634 = vunpack.c.l.b16 %v344
  %v635 = vunpack.c.h.b16 %v344
  %v636 = vunpack.c.l.b16 %v345
  %v637 = vunpack.c.h.b16 %v345
  %v638 = vunpack.c.l.b16 %v346
  %v639 = vunpack.c.h.b16 %v346
  %v640 = vunpack.c.l.b16 %v347
  %v641 = vunpack.c.h.b16 %v347
  %v642 = vunpack.c.l.b16 %v348
  %v643 = vunpack.c.h.b16 %v348
  %v644 = vunpack.c.l.b16 %v349
  %v645 = vunpack.c.h.b16 %v349
  %v646 = vunpack.c.l.b16 %v350
  %v647 = vunpack.c.h.b16 %v350
  %v648 = vunpack.c.l.b16 %v351
  %v649 = vunpack.c.h.b16 %v351
  %v650 = vunpack.c.l.b16 %v352
  %v651 = vunpack.c.h.b16 %v352
  %v652 = vunpack.c.l.b16 %v353
  %v653 = vunpack.c.h.b16 %v353
  %v654 = vunpack.c.l.b16 %v354
  %v655 = vunpack.c.h.b16 %v354
  %v656 = vunpack.c.l.b16 %v355
  %v657 = vunpack.c.h.b16 %v355
  %v658 = vunpack.c.l.b16 %v356
  %v659 = vunpack.c.h.b16 %v356
  %v660 = vunpack.c.l.b16 %v357
  %v661 = vunpack.c.h.b16 %v357
  %v662 = vunpack.c.l.b16 %v358
  %v663 = vunpack.c.h.b16 %v358
  %v664 = vunpack.c.l.b16 %v359
  %v665 = vunpack.c.h.b16 %v359
  %v666 = vunpack.c.l.b16 %v360
  %v667 = vunpack.c.h.b16 %v360
  %v668 = vunpack.c.l.b16 %v361
  %v669 = vunpack.c.h.b16 %v361
  %v670 = vunpack.c.l.b16 %v362
  %v671 = vunpack.c.h.b16 %v362
  %v672 = vunpack.c.l.b16 %v363
  %v673 = vunpack.c.h.b16 %v363
  %v674 = vunpack.c.l.b16 %v364
  %v675 = vunpack.c.h.b16 %v364
  %v676 = vunpack.c.l.b16 %v365
  %v677 = vunpack.c.h.b16 %v365
  %v678 = vunpack.c.l.b16 %v366
  %v679 = vunpack.c.h.b16 %v366
  %v680 = vunpack.c.l.b16 %v367
  %v681 = vunpack.c.h.b16 %v367
  %v682 = vunpack.c.l.b16 %v368
  %v683 = vunpack.c.h.b16 %v368
  %v684 = vunpack.c.l.b16 %v369
  %v685 = vunpack.c.h.b16 %v369
  %v686 = vunpack.c.l.b16 %v370
  %v687 = vunpack.c.h.b16 %v370
  %v688 = vunpack.c.l.b16 %v371
  %v689 = vunpack.c.h.b16 %v371
  %v690 = vunpack.c.l.b16 %v372
  %v691 = vunpack.c.h.b16 %v372
  %v692 = vunpack.c.l.b16 %v373
  %v693 = vunpack.c.h.b16 %v373
  %v694 = vunpack.c.l.b16 %v374
  %v695 = vunpack.c.h.b16 %v374
  %v696 = vunpack.c.l.b16 %v375
  %v697 = vunpack.c.h.b16 %v375
  %v698 = vunpack.c.l.b16 %v376
  %v699 = vunpack.c.h.b16 %v376
  %v700 = vunpack.c.l.b16 %v377
  %v701 = vunpack.c.h.b16 %v377
  %v702 = vunpack.c.l.b16 %v378
  %v703 = vunpack.c.h.b16 %v378
  %v704 = vunpack.c.l.b16 %v379
  %v705 = vunpack.c.h.b16 %v379
  %v706 = vunpack.c.l.b16 %v380
  %v707 = vunpack.c.h.b16 %v380
  %v708 = vunpack.c.l.b16 %v381
  %v709 = vunpack.c.h.b16 %v381
  %v710 = vunpack.c.l.b16 %v382
  %v711 = vunpack.c.h.b16 %v382
  %v712 = vunpack.c.l.b16 %v383
  %v713 = vunpack.c.h.b16 %v383
  %v714 = vunpack.c.l.b16 %v384
  %v715 = vunpack.c.h.b16 %v384
  %v716 = vunpack.c.l.b16 %v385
  %v717 = vunpack.c.h.b16 %v385
  %v718 = vunpack.c.l.b16 %v386
  %v719 = vunpack.c.h.b16 %v386
  %v720 = vunpack.c.l.b16 %v387
  %v721 = vunpack.c.h.b16 %v387
  %v722 = vunpack.c.l.b16 %v388
  %v723 = vunpack.c.h.b16 %v388
  %v724 = vunpack.c.l.b16 %v389
  %v725 = vunpack.c.h.b16 %v389
  %v726 = vunpack.c.l.b16 %v390
  %v727 = vunpack.c.h.b16 %v390
  %v728 = vunpack.c.l.b16 %v391
  %v729 = vunpack.c.h.b16 %v391
  %v730 = vunpack.c.l.b16 %v392
  %v731 = vunpack.c.h.b16 %v392
  %v732 = vunpack.c.l.b16 %v393
  %v733 = vunpack.c.h.b16 %v393
  %v734 = vunpack.c.l.b16 %v394
  %v735 = vunpack.c.h.b16 %v394
  %v736 = vunpack.c.l.b16 %v395
  %v737 = vunpack.c.h.b16 %v395
  %v738 = vunpack.c.l.b16 %v396
  %v739 = vunpack.c.h.b16 %v396
  %v740 = vunpack.c.l.b16 %v397
  %v741 = vunpack.c.h.b16 %v397
  %v742 = vunpack.c.l.b16 %v398
  %v743 = vunpack.c.h.b16 %v398
  %v744 = vunpack.c.l.b16 %v399
  %v745 = vunpack.c.h.b16 %v399
  %v746 = vunpack.c.l.b16 %v400
  %v747 = vunpack.c.h.b16 %v400
  %v748 = vunpack.c.l.b16 %v401
  %v749 = vunpack.c.h.b16 %v401
  %v750 = vunpack.c.l.b16 %v402
  %v751 = vunpack.c.h.b16 %v402
  %v752 = vunpack.c.l.b16 %v403
  %v753 = vunpack.c.h.b16 %v403
  %v754 = vunpack.c.l.b16 %v404
  %v755 = vunpack.c.h.b16 %v404
  %v756 = vunpack.c.l.b16 %v405
  %v757 = vunpack.c.h.b16 %v405
  %v758 = vunpack.c.l.b16 %v406
  %v759 = vunpack.c.h.b16 %v406
  %v760 = vunpack.c.l.b16 %v407
  %v761 = vunpack.c.h.b16 %v407
  %v762 = vunpack.c.l.b16 %v408
  %v763 = vunpack.c.h.b16 %v408
  %v764 = vunpack.c.l.b16 %v409
  %v765 = vunpack.c.h.b16 %v409
  %v766 = vunpack.c.l.b16 %v410
  %v767 = vunpack.c.h.b16 %v410
  %v768 = vunpack.c.l.b16 %v411
  %v769 = vunpack.c.h.b16 %v411
  %v770 = vunpack.c.l.b16 %v412
  %v771 = vunpack.c.h.b16 %v412
  %v772 = vunpack.c.l.b16 %v413
  %v773 = vunpack.c.h.b16 %v413
  %v774 = vunpack.c.l.b16 %v414
  %v775 = vunpack.c.h.b16 %v414
  %v776 = vunpack.c.l.b16 %v415
  %v777 = vunpack.c.h.b16 %v415
  %v778 = vunpack.c.l.b16 %v416
  %v779 = vunpack.c.h.b16 %v416
  %v780 = vunpack.c.l.b16 %v417
  %v781 = vunpack.c.h.b16 %v417
  %v782 = vunpack.c.l.b16 %v418
  %v783 = vunpack.c.h.b16 %v418
  %v784 = vunpack.c.l.b16 %v419
  %v785 = vunpack.c.h.b16 %v419
  %v786 = vunpack.c.l.b16 %v420
  %v787 = vunpack.c.h.b16 %v420
  %v788 = vunpack.c.l.b16 %v421
  %v789 = vunpack.c.h.b16 %v421
  %v790 = vunpack.c.l.b16 %v422
  %v791 = vunpack.c.h.b16 %v422
  %v792 = vunpack.c.l.b16 %v423
  %v793 = vunpack.c.h.b16 %v423
  %v794 = vunpack.c.l.b16 %v424
  %v795 = vunpack.c.h.b16 %v424
  %v796 = vunpack.c.l.b16 %v425
  %v797 = vunpack.c.h.b16 %v425
  %v798 = vunpack.c.l.b16 %v426
  %v799 = vunpack.c.h.b16 %v426
  %v800 = vunpack.c.l.b16 %v427
  %v801 = vunpack.c.h.b16 %v427
  %v802 = vunpack.c.l.b16 %v428
  %v803 = vunpack.c.h.b16 %v428
  %v804 = vunpack.c.l.b16 %v429
  %v805 = vunpack.c.h.b16 %v429
  %v806 = vunpack.c.l.b16 %v430
  %v807 = vunpack.c.h.b16 %v430
  %v808 = vunpack.c.l.b16 %v431
  %v809 = vunpack.c.h.b16 %v431
  %v810 = vunpack.c.l.b16 %v432
  %v811 = vunpack.c.h.b16 %v432
  %v812 = vunpack.c.l.b16 %v433
  %v813 = vunpack.c.h.b16 %v433
  %v814 = vunpack.c.l.b16 %v434
  %v815 = vunpack.c.h.b16 %v434
  %v816 = vunpack.c.l.b16 %v435
  %v817 = vunpack.c.h.b16 %v435
  %v818 = vunpack.c.l.b16 %v436
  %v819 = vunpack.c.h.b16 %v436
  %v820 = vunpack.c.l.b16 %v437
  %v821 = vunpack.c.h.b16 %v437
  %v822 = vunpack.c.l.b16 %v438
  %v823 = vunpack.c.h.b16 %v438
  %v824 = vunpack.c.l.b16 %v439
  %v825 = vunpack.c.h.b16 %v439
  %v826 = vunpack.c.l.b16 %v440
  %v827 = vunpack.c.h.b16 %v440
  %v828 = vunpack.c.l.b16 %v441
  %v829 = vunpack.c.h.b16 %v441
  %v830 = vunpack.c.l.b16 %v442
  %v831 = vunpack.c.h.b16 %v442
  %v832 = vunpack.c.l.b16 %v443
  %v833 = vunpack.c.h.b16 %v443
  %v834 = vunpack.c.l.b16 %v444
  %v835 = vunpack.c.h.b16 %v444
  %v836 = vunpack.c.l.b16 %v445
  %v837 = vunpack.c.h.b16 %v445
  %v838 = vunpack.c.l.b16 %v446
  %v839 = vunpack.c.h.b16 %v446
  %v840 = vunpack.c.l.b16 %v447
  %v841 = vunpack.c.h.b16 %v447
  %v842 = vunpack.c.l.b16 %v448
  %v843 = vunpack.c.h.b16 %v448
  %v844 = vunpack.c.l.b16 %v449
  %v845 = vunpack.c.h.b16 %v449
  %v846 = vunpack.c.l.b16 %v450
  %v847 = vunpack.c.h.b16 %v450
  %v848 = vunpack.c.l.b16 %v451
  %v849 = vunpack.c.h.b16 %v451
  %v850 = vunpack.c.l.b16 %v452
  %v851 = vunpack.c.h.b16 %v452
  %v852 = vunpack.c.l.b16 %v453
  %v853 = vunpack.c.h.b16 %v453
  %v854 = vunpack.c.l.b16 %v454
  %v855 = vunpack.c.h.b16 %v454
  %v856 = vunpack.c.l.b16 %v455
  %v857 = vunpack.c.h.b16 %v455
  %v858 = vunpack.c.l.b16 %v456
  %v859 = vunpack.c.h.b16 %v456
  %v860 = vunpack.c.l.b16 %v457
  %v861 = vunpack.c.h.b16 %v457
  %v862 = vunpack.c.l.b16 %v458
  %v863 = vunpack.c.h.b16 %v458
  %v864 = vunpack.c.l.b16 %v459
  %v865 = vunpack.c.h.b16 %v459
  %v866 = vpack.c.b16 %v614, %v610
  %v867 = vpack.c.b16 %v615, %v611
  %v868 = vpack.c.b16 %v616, %v612
  %v869 = vpack.c.b16 %v617, %v613
  %v870 = vpack.c.b16 %v622, %v618
  %v871 = vpack.c.b16 %v623, %v619
  %v872 = vpack.c.b16 %v624, %v620
  %v873 = vpack.c.b16 %v625, %v621
  %v874 = vpack.c.b16 %v630, %v626
  %v875 = vpack.c.b16 %v631, %v627
  %v876 = vpack.c.b16 %v632, %v628
  %v877 = vpack.c.b16 %v633, %v629
  %v878 = vpack.c.b16 %v638, %v634
  %v879 = vpack.c.b16 %v639, %v635
  %v880 = vpack.c.b16 %v640, %v636
  %v881 = vpack.c.b16 %v641, %v637
  %v882 = vpack.c.b16 %v646, %v642
  %v883 = vpack.c.b16 %v647, %v643
  %v884 = vpack.c.b16 %v648, %v644
  %v885 = vpack.c.b16 %v649, %v645
  %v886 = vpack.c.b16 %v654, %v650
  %v887 = vpack.c.b16 %v655, %v651
  %v888 = vpack.c.b16 %v656, %v652
  %v889 = vpack.c.b16 %v657, %v653
  %v890 = vpack.c.b16 %v662, %v658
  %v891 = vpack.c.b16 %v663, %v659
  %v892 = vpack.c.b16 %v664, %v660
  %v893 = vpack.c.b16 %v665, %v661
  %v894 = vpack.c.b16 %v670, %v666
  %v895 = vpack.c.b16 %v671, %v667
  %v896 = vpack.c.b16 %v672, %v668
  %v897 = vpack.c.b16 %v673, %v669
  %v898 = vpack.c.b16 %v678, %v674
  %v899 = vpack.c.b16 %v679, %v675
  %v900 = vpack.c.b16 %v680, %v676
  %v901 = vpack.c.b16 %v681, %v677
  %v902 = vpack.c.b16 %v686, %v682
  %v903 = vpack.c.b16 %v687, %v683
  %v904 = vpack.c.b16 %v688, %v684
  %v905 = vpack.c.b16 %v689, %v685
  %v906 = vpack.c.b16 %v694, %v690
  %v907 = vpack.c.b16 %v695, %v691
  %v908 = vpack.c.b16 %v696, %v692
  %v909 = vpack.c.b16 %v697, %v693
  %v910 = vpack.c.b16 %v702, %v698
  %v911 = vpack.c.b16 %v703, %v699
  %v912 = vpack.c.b16 %v704, %v700
  %v913 = vpack.c.b16 %v705, %v701
  %v914 = vpack.c.b16 %v710, %v706
  %v915 = vpack.c.b16 %v711, %v707
  %v916 = vpack.c.b16 %v712, %v708
  %v917 = vpack.c.b16 %v713, %v709
  %v918 = vpack.c.b16 %v718, %v714
  %v919 = vpack.c.b16 %v719, %v715
  %v920 = vpack.c.b16 %v720, %v716
  %v921 = vpack.c.b16 %v721, %v717
  %v922 = vpack.c.b16 %v726, %v722
  %v923 = vpack.c.b16 %v727, %v723
  %v924 = vpack.c.b16 %v728, %v724
  %v925 = vpack.c.b16 %v729, %v725
  %v926 = vpack.c.b16 %v734, %v730
  %v927 = vpack.c.b16 %v735, %v731
  %v928 = vpack.c.b16 %v736, %v732
  %v929 = vpack.c.b16 %v737, %v733
  %v930 = vpack.c.b16 %v742, %v738
  %v931 = vpack.c.b16 %v743, %v739
  %v932 = vpack.c.b16 %v744, %v740
  %v933 = vpack.c.b16 %v745, %v741
  %v934 = vpack.c.b16 %v750, %v746
  %v935 = vpack.c.b16 %v751, %v747
  %v936 = vpack.c.b16 %v752, %v748
  %v937 = vpack.c.b16 %v753, %v749
  %v938 = vpack.c.b16 %v758, %v754
  %v939 = vpack.c.b16 %v759, %v755
  %v940 = vpack.c.b16 %v760, %v756
  %v941 = vpack.c.b16 %v761, %v757
  %v942 = vpack.c.b16 %v766, %v762
  %v943 = vpack.c.b16 %v767, %v763
  %v944 = vpack.c.b16 %v768, %v764
  %v945 = vpack.c.b16 %v769, %v765
  %v946 = vpack.c.b16 %v774, %v770
  %v947 = vpack.c.b16 %v775, %v771
  %v948 = vpack.c.b16 %v776, %v772
  %v949 = vpack.c.b16 %v777, %v773
  %v950 = vpack.c.b16 %v782, %v778
  %v951 = vpack.c.b16 %v783, %v779
  %v952 = vpack.c.b16 %v784, %v780
  %v953 = vpack.c.b16 %v785, %v781
  %v954 = vpack.c.b16 %v790, %v786
  %v955 = vpack.c.b16 %v791, %v787
  %v956 = vpack.c.b16 %v792, %v788
  %v957 = vpack.c.b16 %v793, %v789
  %v958 = vpack.c.b16 %v798, %v794
  %v959 = vpack.c.b16 %v799, %v795
  %v960 = vpack.c.b16 %v800, %v796
  %v961 = vpack.c.b16 %v801, %v797
  %v962 = vpack.c.b16 %v806, %v802
  %v963 = vpack.c.b16 %v807, %v803
  %v964 = vpack.c.b16 %v808, %v804
  %v965 = vpack.c.b16 %v809, %v805
  %v966 = vpack.c.b16 %v814, %v810
  %v967 = vpack.c.b16 %v815, %v811
  %v968 = vpack.c.b16 %v816, %v812
  %v969 = vpack.c.b16 %v817, %v813
  %v970 = vpack.c.b16 %v822, %v818
  %v971 = vpack.c.b16 %v823, %v819
  %v972 = vpack.c.b16 %v824, %v820
  %v973 = vpack.c.b16 %v825, %v821
  %v974 = vpack.c.b16 %v830, %v826
  %v975 = vpack.c.b16 %v831, %v827
  %v976 = vpack.c.b16 %v832, %v828
  %v977 = vpack.c.b16 %v833, %v829
  %v978 = vpack.c.b16 %v838, %v834
  %v979 = vpack.c.b16 %v839, %v835
  %v980 = vpack.c.b16 %v840, %v836
  %v981 = vpack.c.b16 %v841, %v837
  %v982 = vpack.c.b16 %v846, %v842
  %v983 = vpack.c.b16 %v847, %v843
  %v984 = vpack.c.b16 %v848, %v844
  %v985 = vpack.c.b16 %v849, %v845
  %v986 = vpack.c.b16 %v854, %v850
  %v987 = vpack.c.b16 %v855, %v851
  %v988 = vpack.c.b16 %v856, %v852
  %v989 = vpack.c.b16 %v857, %v853
  %v990 = vpack.c.b16 %v862, %v858
  %v991 = vpack.c.b16 %v863, %v859
  %v992 = vpack.c.b16 %v864, %v860
  %v993 = vpack.c.b16 %v865, %v861
  %1122 = vmatprep.subr.bf16.mxu0 %v895
  %1123 = vmatpush1.bf16.msra.mxu0 %v894
  %1124 = vmatprep.subr.bf16.mxu0 %v891
  %1125 = vmatpush1.bf16.msra.mxu0 %v890
  %1126 = vmatprep.subr.bf16.mxu0 %v887
  %1127 = vmatpush1.bf16.msra.mxu0 %v886
  %1128 = vmatprep.subr.bf16.mxu0 %v883
  %1129 = vmatpush1.bf16.msra.mxu0 %v882
  %1130 = vmatprep.subr.bf16.mxu0 %v879
  %1131 = vmatpush1.bf16.msra.mxu0 %v878
  %1132 = vmatprep.subr.bf16.mxu0 %v875
  %1133 = vmatpush1.bf16.msra.mxu0 %v874
  %1134 = vmatprep.subr.bf16.mxu0 %v871
  %1135 = vmatpush1.bf16.msra.mxu0 %v870
  %1136 = vmatprep.subr.bf16.mxu0 %v867
  %1137 = vmatpush1.bf16.msra.mxu0 %v866
  %1138 = vmatprep.subr.bf16.mxu0 %v927
  %1139 = vmatpush2.bf16.msra.mxu0 %v926
  %1140 = vmatprep.subr.bf16.mxu0 %v923
  %1141 = vmatpush2.bf16.msra.mxu0 %v922
  %1142 = vmatprep.subr.bf16.mxu0 %v919
  %1143 = vmatpush2.bf16.msra.mxu0 %v918
  %1144 = vmatprep.subr.bf16.mxu0 %v915
  %1145 = vmatpush2.bf16.msra.mxu0 %v914
  %1146 = vmatprep.subr.bf16.mxu0 %v911
  %1147 = vmatpush2.bf16.msra.mxu0 %v910
  %1148 = vmatprep.subr.bf16.mxu0 %v907
  %1149 = vmatpush2.bf16.msra.mxu0 %v906
  %1150 = vmatprep.subr.bf16.mxu0 %v903
  %1151 = vmatpush2.bf16.msra.mxu0 %v902
  %1152 = vmatprep.subr.bf16.mxu0 %v899
  %1153 = vmatpush2.bf16.msra.mxu0 %v898
  %1154 = vmatprep.mubr.bf16.mxu0 %v329
  %1155 = vmatmul.mubr.bf16.gmra.mxu0 %v328
  %v1156 = vpop.f32.mrf.mxu0
  %v1157 = vadd.f32 %v465, %v1156
  %v1158 = vpop.f32.mrf.mxu0
  %v1159 = vadd.f32 %v469, %v1158
  %v1160 = vpop.f32.mrf.mxu0
  %v1161 = vpop.f32.mrf.mxu0
  %1162 = vdwg.mxu0
  %1163 = vmatprep.subr.bf16.mxu0 %v959
  %1164 = vmatpush1.bf16.msra.mxu0 %v958
  %1165 = vmatprep.subr.bf16.mxu0 %v955
  %1166 = vmatpush1.bf16.msra.mxu0 %v954
  %1167 = vmatprep.subr.bf16.mxu0 %v951
  %1168 = vmatpush1.bf16.msra.mxu0 %v950
  %1169 = vmatprep.subr.bf16.mxu0 %v947
  %1170 = vmatpush1.bf16.msra.mxu0 %v946
  %1171 = vmatprep.subr.bf16.mxu0 %v943
  %1172 = vmatpush1.bf16.msra.mxu0 %v942
  %1173 = vmatprep.subr.bf16.mxu0 %v939
  %1174 = vmatpush1.bf16.msra.mxu0 %v938
  %1175 = vmatprep.subr.bf16.mxu0 %v935
  %1176 = vmatpush1.bf16.msra.mxu0 %v934
  %1177 = vmatprep.subr.bf16.mxu0 %v931
  %1178 = vmatpush1.bf16.msra.mxu0 %v930
  %1179 = vmatprep.subr.bf16.mxu0 %v991
  %1180 = vmatpush2.bf16.msra.mxu0 %v990
  %1181 = vmatprep.subr.bf16.mxu0 %v987
  %1182 = vmatpush2.bf16.msra.mxu0 %v986
  %1183 = vmatprep.subr.bf16.mxu0 %v983
  %1184 = vmatpush2.bf16.msra.mxu0 %v982
  %1185 = vmatprep.subr.bf16.mxu0 %v979
  %1186 = vmatpush2.bf16.msra.mxu0 %v978
  %1187 = vmatprep.subr.bf16.mxu0 %v975
  %1188 = vmatpush2.bf16.msra.mxu0 %v974
  %1189 = vmatprep.subr.bf16.mxu0 %v971
  %1190 = vmatpush2.bf16.msra.mxu0 %v970
  %1191 = vmatprep.subr.bf16.mxu0 %v967
  %1192 = vmatpush2.bf16.msra.mxu0 %v966
  %1193 = vmatprep.subr.bf16.mxu0 %v963
  %1194 = vmatpush2.bf16.msra.mxu0 %v962
  %1195 = vmatprep.mubr.bf16.mxu0 %v331
  %1196 = vmatmul.mubr.bf16.gmra.mxu0 %v330
  %v1197 = vpop.f32.mrf.mxu0
  %v1198 = vadd.f32 %v1157, %v1197
  %v1199 = vpop.f32.mrf.mxu0
  %v1200 = vadd.f32 %v1159, %v1199
  %v1201 = vpop.f32.mrf.mxu0
  %v1202 = vpop.f32.mrf.mxu0
  %1203 = vdwg.mxu0
  %1204 = vmatprep.subr.bf16.mxu0 %v897
  %1205 = vmatpush1.bf16.msra.mxu0 %v896
  %1206 = vmatprep.subr.bf16.mxu0 %v893
  %1207 = vmatpush1.bf16.msra.mxu0 %v892
  %1208 = vmatprep.subr.bf16.mxu0 %v889
  %1209 = vmatpush1.bf16.msra.mxu0 %v888
  %1210 = vmatprep.subr.bf16.mxu0 %v885
  %1211 = vmatpush1.bf16.msra.mxu0 %v884
  %1212 = vmatprep.subr.bf16.mxu0 %v881
  %1213 = vmatpush1.bf16.msra.mxu0 %v880
  %1214 = vmatprep.subr.bf16.mxu0 %v877
  %1215 = vmatpush1.bf16.msra.mxu0 %v876
  %1216 = vmatprep.subr.bf16.mxu0 %v873
  %1217 = vmatpush1.bf16.msra.mxu0 %v872
  %1218 = vmatprep.subr.bf16.mxu0 %v869
  %1219 = vmatpush1.bf16.msra.mxu0 %v868
  %1220 = vmatprep.subr.bf16.mxu0 %v929
  %1221 = vmatpush2.bf16.msra.mxu0 %v928
  %1222 = vmatprep.subr.bf16.mxu0 %v925
  %1223 = vmatpush2.bf16.msra.mxu0 %v924
  %1224 = vmatprep.subr.bf16.mxu0 %v921
  %1225 = vmatpush2.bf16.msra.mxu0 %v920
  %1226 = vmatprep.subr.bf16.mxu0 %v917
  %1227 = vmatpush2.bf16.msra.mxu0 %v916
  %1228 = vmatprep.subr.bf16.mxu0 %v913
  %1229 = vmatpush2.bf16.msra.mxu0 %v912
  %1230 = vmatprep.subr.bf16.mxu0 %v909
  %1231 = vmatpush2.bf16.msra.mxu0 %v908
  %1232 = vmatprep.subr.bf16.mxu0 %v905
  %1233 = vmatpush2.bf16.msra.mxu0 %v904
  %1234 = vmatprep.subr.bf16.mxu0 %v901
  %1235 = vmatpush2.bf16.msra.mxu0 %v900
  %1236 = vmatprep.mubr.bf16.mxu0 %v329
  %1237 = vmatmul.mubr.bf16.gmra.mxu0 %v328
  %v1238 = vpop.f32.mrf.mxu0
  %v1239 = vadd.f32 %v473, %v1238
  %v1240 = vpop.f32.mrf.mxu0
  %v1241 = vadd.f32 %v477, %v1240
  %v1242 = vpop.f32.mrf.mxu0
  %v1243 = vpop.f32.mrf.mxu0
  %1244 = vdwg.mxu0
  %1245 = vmatprep.subr.bf16.mxu0 %v961
  %1246 = vmatpush1.bf16.msra.mxu0 %v960
  %1247 = vmatprep.subr.bf16.mxu0 %v957
  %1248 = vmatpush1.bf16.msra.mxu0 %v956
  %1249 = vmatprep.subr.bf16.mxu0 %v953
  %1250 = vmatpush1.bf16.msra.mxu0 %v952
  %1251 = vmatprep.subr.bf16.mxu0 %v949
  %1252 = vmatpush1.bf16.msra.mxu0 %v948
  %1253 = vmatprep.subr.bf16.mxu0 %v945
  %1254 = vmatpush1.bf16.msra.mxu0 %v944
  %1255 = vmatprep.subr.bf16.mxu0 %v941
  %1256 = vmatpush1.bf16.msra.mxu0 %v940
  %1257 = vmatprep.subr.bf16.mxu0 %v937
  %1258 = vmatpush1.bf16.msra.mxu0 %v936
  %1259 = vmatprep.subr.bf16.mxu0 %v933
  %1260 = vmatpush1.bf16.msra.mxu0 %v932
  %1261 = vmatprep.subr.bf16.mxu0 %v993
  %1262 = vmatpush2.bf16.msra.mxu0 %v992
  %1263 = vmatprep.subr.bf16.mxu0 %v989
  %1264 = vmatpush2.bf16.msra.mxu0 %v988
  %1265 = vmatprep.subr.bf16.mxu0 %v985
  %1266 = vmatpush2.bf16.msra.mxu0 %v984
  %1267 = vmatprep.subr.bf16.mxu0 %v981
  %1268 = vmatpush2.bf16.msra.mxu0 %v980
  %1269 = vmatprep.subr.bf16.mxu0 %v977
  %1270 = vmatpush2.bf16.msra.mxu0 %v976
  %1271 = vmatprep.subr.bf16.mxu0 %v973
  %1272 = vmatpush2.bf16.msra.mxu0 %v972
  %1273 = vmatprep.subr.bf16.mxu0 %v969
  %1274 = vmatpush2.bf16.msra.mxu0 %v968
  %1275 = vmatprep.subr.bf16.mxu0 %v965
  %1276 = vmatpush2.bf16.msra.mxu0 %v964
  %1277 = vmatprep.mubr.bf16.mxu0 %v331
  %1278 = vmatmul.mubr.bf16.gmra.mxu0 %v330
  %v1279 = vpop.f32.mrf.mxu0
  %v1280 = vadd.f32 %v1239, %v1279
  %v1281 = vpop.f32.mrf.mxu0
  %v1282 = vadd.f32 %v1241, %v1281
  %v1283 = vpop.f32.mrf.mxu0
  %v1284 = vpop.f32.mrf.mxu0
  %1285 = vdwg.mxu0
  %v1286 = vmax.f32 %v1198, 0.0
  %v1287 = vmax.f32 %v1200, 0.0
  %v1288 = vmax.f32 %v1280, 0.0
  %v1289 = vmax.f32 %v1282, 0.0
  %v1290 = vpack.c.bf16 %v1286, %v1286
  %v1291 = vpack.c.bf16 %v1287, %v1287
  %v1292 = vpack.c.bf16 %v1288, %v1288
  %v1293 = vpack.c.bf16 %v1289, %v1289
  %v1294 = vld [vmem:[%s5] sm:$0xf]
  %v1295 = vld [vmem:[%s5 + $0x4] sm:$0xf]
  %v1296 = vld [vmem:[%s5 + $0x8] sm:$0xf]
  %v1297 = vld [vmem:[%s5 + $0xc] sm:$0xf]
  %v1298 = vld [vmem:[%s5 + $0x10] sm:$0xf]
  %v1299 = vld [vmem:[%s5 + $0x14] sm:$0xf]
  %v1300 = vld [vmem:[%s5 + $0x18] sm:$0xf]
  %v1301 = vld [vmem:[%s5 + $0x1c] sm:$0xf]
  %v1302 = vld [vmem:[%s5 + $0x20] sm:$0xf]
  %v1303 = vld [vmem:[%s5 + $0x24] sm:$0xf]
  %v1304 = vld [vmem:[%s5 + $0x28] sm:$0xf]
  %v1305 = vld [vmem:[%s5 + $0x2c] sm:$0xf]
  %v1306 = vld [vmem:[%s5 + $0x30] sm:$0xf]
  %v1307 = vld [vmem:[%s5 + $0x34] sm:$0xf]
  %v1308 = vld [vmem:[%s5 + $0x38] sm:$0xf]
  %v1309 = vld [vmem:[%s5 + $0x3c] sm:$0xf]
  %v1310 = vld [vmem:[%s5 + $0x40] sm:$0xf]
  %v1311 = vld [vmem:[%s5 + $0x44] sm:$0xf]
  %v1312 = vld [vmem:[%s5 + $0x48] sm:$0xf]
  %v1313 = vld [vmem:[%s5 + $0x4c] sm:$0xf]
  %v1314 = vld [vmem:[%s5 + $0x50] sm:$0xf]
  %v1315 = vld [vmem:[%s5 + $0x54] sm:$0xf]
  %v1316 = vld [vmem:[%s5 + $0x58] sm:$0xf]
  %v1317 = vld [vmem:[%s5 + $0x5c] sm:$0xf]
  %v1318 = vld [vmem:[%s5 + $0x60] sm:$0xf]
  %v1319 = vld [vmem:[%s5 + $0x64] sm:$0xf]
  %v1320 = vld [vmem:[%s5 + $0x68] sm:$0xf]
  %v1321 = vld [vmem:[%s5 + $0x6c] sm:$0xf]
  %v1322 = vld [vmem:[%s5 + $0x70] sm:$0xf]
  %v1323 = vld [vmem:[%s5 + $0x74] sm:$0xf]
  %v1324 = vld [vmem:[%s5 + $0x78] sm:$0xf]
  %v1325 = vld [vmem:[%s5 + $0x7c] sm:$0xf]
  %v1326 = vld [vmem:[%s5 + $0x80] sm:$0xf]
  %v1327 = vld [vmem:[%s5 + $0x84] sm:$0xf]
  %v1328 = vld [vmem:[%s5 + $0x88] sm:$0xf]
  %v1329 = vld [vmem:[%s5 + $0x8c] sm:$0xf]
  %v1330 = vld [vmem:[%s5 + $0x90] sm:$0xf]
  %v1331 = vld [vmem:[%s5 + $0x94] sm:$0xf]
  %v1332 = vld [vmem:[%s5 + $0x98] sm:$0xf]
  %v1333 = vld [vmem:[%s5 + $0x9c] sm:$0xf]
  %v1334 = vld [vmem:[%s5 + $0xa0] sm:$0xf]
  %v1335 = vld [vmem:[%s5 + $0xa4] sm:$0xf]
  %v1336 = vld [vmem:[%s5 + $0xa8] sm:$0xf]
  %v1337 = vld [vmem:[%s5 + $0xac] sm:$0xf]
  %v1338 = vld [vmem:[%s5 + $0xb0] sm:$0xf]
  %v1339 = vld [vmem:[%s5 + $0xb4] sm:$0xf]
  %v1340 = vld [vmem:[%s5 + $0xb8] sm:$0xf]
  %v1341 = vld [vmem:[%s5 + $0xbc] sm:$0xf]
  %v1342 = vld [vmem:[%s5 + $0xc0] sm:$0xf]
  %v1343 = vld [vmem:[%s5 + $0xc4] sm:$0xf]
  %v1344 = vld [vmem:[%s5 + $0xc8] sm:$0xf]
  %v1345 = vld [vmem:[%s5 + $0xcc] sm:$0xf]
  %v1346 = vld [vmem:[%s5 + $0xd0] sm:$0xf]
  %v1347 = vld [vmem:[%s5 + $0xd4] sm:$0xf]
  %v1348 = vld [vmem:[%s5 + $0xd8] sm:$0xf]
  %v1349 = vld [vmem:[%s5 + $0xdc] sm:$0xf]
  %v1350 = vld [vmem:[%s5 + $0xe0] sm:$0xf]
  %v1351 = vld [vmem:[%s5 + $0xe4] sm:$0xf]
  %v1352 = vld [vmem:[%s5 + $0xe8] sm:$0xf]
  %v1353 = vld [vmem:[%s5 + $0xec] sm:$0xf]
  %v1354 = vld [vmem:[%s5 + $0xf0] sm:$0xf]
  %v1355 = vld [vmem:[%s5 + $0xf4] sm:$0xf]
  %v1356 = vld [vmem:[%s5 + $0xf8] sm:$0xf]
  %v1357 = vld [vmem:[%s5 + $0xfc] sm:$0xf]
  %v1358 = vld [vmem:[%s6] sm:$0x1]
  %v1360 = vlaneseq
  %v1361 = vshrl.u32 %v1360, 7
  %v1362 = vsub.s32 0, %v1361
  %v1363 = vrot.slane %v1358, %v1362
  %v1429 = vunpack.c.l.b16 %v1294
  %v1430 = vunpack.c.l.b16 %v1295
  %v1431 = vunpack.c.l.b16 %v1296
  %v1432 = vunpack.c.l.b16 %v1297
  %v1433 = vunpack.c.l.b16 %v1298
  %v1434 = vunpack.c.l.b16 %v1299
  %v1435 = vunpack.c.l.b16 %v1300
  %v1436 = vunpack.c.l.b16 %v1301
  %v1437 = vunpack.c.l.b16 %v1302
  %v1438 = vunpack.c.l.b16 %v1303
  %v1439 = vunpack.c.l.b16 %v1304
  %v1440 = vunpack.c.l.b16 %v1305
  %v1441 = vunpack.c.l.b16 %v1306
  %v1442 = vunpack.c.l.b16 %v1307
  %v1443 = vunpack.c.l.b16 %v1308
  %v1444 = vunpack.c.l.b16 %v1309
  %v1445 = vunpack.c.l.b16 %v1310
  %v1446 = vunpack.c.l.b16 %v1311
  %v1447 = vunpack.c.l.b16 %v1312
  %v1448 = vunpack.c.l.b16 %v1313
  %v1449 = vunpack.c.l.b16 %v1314
  %v1450 = vunpack.c.l.b16 %v1315
  %v1451 = vunpack.c.l.b16 %v1316
  %v1452 = vunpack.c.l.b16 %v1317
  %v1453 = vunpack.c.l.b16 %v1318
  %v1454 = vunpack.c.l.b16 %v1319
  %v1455 = vunpack.c.l.b16 %v1320
  %v1456 = vunpack.c.l.b16 %v1321
  %v1457 = vunpack.c.l.b16 %v1322
  %v1458 = vunpack.c.l.b16 %v1323
  %v1459 = vunpack.c.l.b16 %v1324
  %v1460 = vunpack.c.l.b16 %v1325
  %v1461 = vunpack.c.l.b16 %v1326
  %v1462 = vunpack.c.l.b16 %v1327
  %v1463 = vunpack.c.l.b16 %v1328
  %v1464 = vunpack.c.l.b16 %v1329
  %v1465 = vunpack.c.l.b16 %v1330
  %v1466 = vunpack.c.l.b16 %v1331
  %v1467 = vunpack.c.l.b16 %v1332
  %v1468 = vunpack.c.l.b16 %v1333
  %v1469 = vunpack.c.l.b16 %v1334
  %v1470 = vunpack.c.l.b16 %v1335
  %v1471 = vunpack.c.l.b16 %v1336
  %v1472 = vunpack.c.l.b16 %v1337
  %v1473 = vunpack.c.l.b16 %v1338
  %v1474 = vunpack.c.l.b16 %v1339
  %v1475 = vunpack.c.l.b16 %v1340
  %v1476 = vunpack.c.l.b16 %v1341
  %v1477 = vunpack.c.l.b16 %v1342
  %v1478 = vunpack.c.l.b16 %v1343
  %v1479 = vunpack.c.l.b16 %v1344
  %v1480 = vunpack.c.l.b16 %v1345
  %v1481 = vunpack.c.l.b16 %v1346
  %v1482 = vunpack.c.l.b16 %v1347
  %v1483 = vunpack.c.l.b16 %v1348
  %v1484 = vunpack.c.l.b16 %v1349
  %v1485 = vunpack.c.l.b16 %v1350
  %v1486 = vunpack.c.l.b16 %v1351
  %v1487 = vunpack.c.l.b16 %v1352
  %v1488 = vunpack.c.l.b16 %v1353
  %v1489 = vunpack.c.l.b16 %v1354
  %v1490 = vunpack.c.l.b16 %v1355
  %v1491 = vunpack.c.l.b16 %v1356
  %v1492 = vunpack.c.l.b16 %v1357
  %v1493 = vpack.c.b16 %v1430, %v1429
  %v1494 = vpack.c.b16 %v1432, %v1431
  %v1495 = vpack.c.b16 %v1434, %v1433
  %v1496 = vpack.c.b16 %v1436, %v1435
  %v1497 = vpack.c.b16 %v1438, %v1437
  %v1498 = vpack.c.b16 %v1440, %v1439
  %v1499 = vpack.c.b16 %v1442, %v1441
  %v1500 = vpack.c.b16 %v1444, %v1443
  %v1501 = vpack.c.b16 %v1446, %v1445
  %v1502 = vpack.c.b16 %v1448, %v1447
  %v1503 = vpack.c.b16 %v1450, %v1449
  %v1504 = vpack.c.b16 %v1452, %v1451
  %v1505 = vpack.c.b16 %v1454, %v1453
  %v1506 = vpack.c.b16 %v1456, %v1455
  %v1507 = vpack.c.b16 %v1458, %v1457
  %v1508 = vpack.c.b16 %v1460, %v1459
  %v1509 = vpack.c.b16 %v1462, %v1461
  %v1510 = vpack.c.b16 %v1464, %v1463
  %v1511 = vpack.c.b16 %v1466, %v1465
  %v1512 = vpack.c.b16 %v1468, %v1467
  %v1513 = vpack.c.b16 %v1470, %v1469
  %v1514 = vpack.c.b16 %v1472, %v1471
  %v1515 = vpack.c.b16 %v1474, %v1473
  %v1516 = vpack.c.b16 %v1476, %v1475
  %v1517 = vpack.c.b16 %v1478, %v1477
  %v1518 = vpack.c.b16 %v1480, %v1479
  %v1519 = vpack.c.b16 %v1482, %v1481
  %v1520 = vpack.c.b16 %v1484, %v1483
  %v1521 = vpack.c.b16 %v1486, %v1485
  %v1522 = vpack.c.b16 %v1488, %v1487
  %v1523 = vpack.c.b16 %v1490, %v1489
  %v1524 = vpack.c.b16 %v1492, %v1491
  %1557 = vmatprep.subr.bf16.mxu0 0
  %1558 = vmatpush1.bf16.msra.mxu0 %v1500
  %1559 = vmatprep.subr.bf16.mxu0 0
  %1560 = vmatpush1.bf16.msra.mxu0 %v1499
  %1561 = vmatprep.subr.bf16.mxu0 0
  %1562 = vmatpush1.bf16.msra.mxu0 %v1498
  %1563 = vmatprep.subr.bf16.mxu0 0
  %1564 = vmatpush1.bf16.msra.mxu0 %v1497
  %1565 = vmatprep.subr.bf16.mxu0 0
  %1566 = vmatpush1.bf16.msra.mxu0 %v1496
  %1567 = vmatprep.subr.bf16.mxu0 0
  %1568 = vmatpush1.bf16.msra.mxu0 %v1495
  %1569 = vmatprep.subr.bf16.mxu0 0
  %1570 = vmatpush1.bf16.msra.mxu0 %v1494
  %1571 = vmatprep.subr.bf16.mxu0 0
  %1572 = vmatpush1.bf16.msra.mxu0 %v1493
  %1573 = vmatprep.subr.bf16.mxu0 0
  %1574 = vmatpush2.bf16.msra.mxu0 %v1508
  %1575 = vmatprep.subr.bf16.mxu0 0
  %1576 = vmatpush2.bf16.msra.mxu0 %v1507
  %1577 = vmatprep.subr.bf16.mxu0 0
  %1578 = vmatpush2.bf16.msra.mxu0 %v1506
  %1579 = vmatprep.subr.bf16.mxu0 0
  %1580 = vmatpush2.bf16.msra.mxu0 %v1505
  %1581 = vmatprep.subr.bf16.mxu0 0
  %1582 = vmatpush2.bf16.msra.mxu0 %v1504
  %1583 = vmatprep.subr.bf16.mxu0 0
  %1584 = vmatpush2.bf16.msra.mxu0 %v1503
  %1585 = vmatprep.subr.bf16.mxu0 0
  %1586 = vmatpush2.bf16.msra.mxu0 %v1502
  %1587 = vmatprep.subr.bf16.mxu0 0
  %1588 = vmatpush2.bf16.msra.mxu0 %v1501
  %1589 = vmatprep.mubr.bf16.mxu0 %v1291
  %1590 = vmatmul.mubr.bf16.gmra.mxu0 %v1290
  %v1591 = vpop.f32.mrf.mxu0
  %v1592 = vadd.f32 %v1363, %v1591
  %v1593 = vpop.f32.mrf.mxu0
  %v1594 = vpop.f32.mrf.mxu0
  %v1595 = vpop.f32.mrf.mxu0
  %1596 = vdwg.mxu0
  %1597 = vmatprep.subr.bf16.mxu0 0
  %1598 = vmatpush1.bf16.msra.mxu0 %v1516
  %1599 = vmatprep.subr.bf16.mxu0 0
  %1600 = vmatpush1.bf16.msra.mxu0 %v1515
  %1601 = vmatprep.subr.bf16.mxu0 0
  %1602 = vmatpush1.bf16.msra.mxu0 %v1514
  %1603 = vmatprep.subr.bf16.mxu0 0
  %1604 = vmatpush1.bf16.msra.mxu0 %v1513
  %1605 = vmatprep.subr.bf16.mxu0 0
  %1606 = vmatpush1.bf16.msra.mxu0 %v1512
  %1607 = vmatprep.subr.bf16.mxu0 0
  %1608 = vmatpush1.bf16.msra.mxu0 %v1511
  %1609 = vmatprep.subr.bf16.mxu0 0
  %1610 = vmatpush1.bf16.msra.mxu0 %v1510
  %1611 = vmatprep.subr.bf16.mxu0 0
  %1612 = vmatpush1.bf16.msra.mxu0 %v1509
  %1613 = vmatprep.subr.bf16.mxu0 0
  %1614 = vmatpush2.bf16.msra.mxu0 %v1524
  %1615 = vmatprep.subr.bf16.mxu0 0
  %1616 = vmatpush2.bf16.msra.mxu0 %v1523
  %1617 = vmatprep.subr.bf16.mxu0 0
  %1618 = vmatpush2.bf16.msra.mxu0 %v1522
  %1619 = vmatprep.subr.bf16.mxu0 0
  %1620 = vmatpush2.bf16.msra.mxu0 %v1521
  %1621 = vmatprep.subr.bf16.mxu0 0
  %1622 = vmatpush2.bf16.msra.mxu0 %v1520
  %1623 = vmatprep.subr.bf16.mxu0 0
  %1624 = vmatpush2.bf16.msra.mxu0 %v1519
  %1625 = vmatprep.subr.bf16.mxu0 0
  %1626 = vmatpush2.bf16.msra.mxu0 %v1518
  %1627 = vmatprep.subr.bf16.mxu0 0
  %1628 = vmatpush2.bf16.msra.mxu0 %v1517
  %1629 = vmatprep.mubr.bf16.mxu0 %v1293
  %1630 = vmatmul.mubr.bf16.gmra.mxu0 %v1292
  %v1631 = vpop.f32.mrf.mxu0
  %v1632 = vadd.f32 %v1592, %v1631
  %v1633 = vpop.f32.mrf.mxu0
  %v1634 = vpop.f32.mrf.mxu0
  %v1635 = vpop.f32.mrf.mxu0
  %1636 = vdwg.mxu0
  %1637 = vst [vmem:[%s7] sm:$0xff] %v1632
  // Predicated region
  $region30: #{mlp_forward.1} parent=0 // pred_check
    _
  $region31: #{mlp_forward.1} parent=0 // pred_check_branch
    %1639 = sbr.rel (0) target = $region33
  $region32: #{mlp_forward.1} parent=0 // pred_region
    _
  $region33: #{mlp_forward.1} parent=0 // pred_fallthru
    _
  // Predicated region
  $region34: #{mlp_forward.1} parent=0 // pred_check
    _
  $region35: #{mlp_forward.1} parent=0 // pred_check_branch
    %1641 = sbr.rel (0) target = $region37
  $region36: #{mlp_forward.1} parent=0 // pred_region
    _
  $region37: #{mlp_forward.1} parent=0 // pred_fallthru
    _

</llo_original>
